<compile_context>
chip_gen: v6e
topology: v6e:2x2x1
jax: 0.10.0
libtpu: 0.0.40
codegen_flags: <defaults>
</compile_context>

<pallas_src>
import jax
import jax.numpy as jnp
from jax.experimental import pallas as pl
from jax.experimental.pallas import tpu as pltpu

_LANE = 128


def _make_focal_kernel(rows, tile_rows, needs_mask):
    """Builds the kernel; rows / tile_rows / needs_mask are static Python values."""

    def kernel(pred_ref, gt_ref, out_ref, loss_acc, cnt_acc):
        i = pl.program_id(0)

        @pl.when(i == 0)
        def _():
            loss_acc[...] = jnp.zeros_like(loss_acc)
            cnt_acc[...] = jnp.zeros_like(cnt_acc)

        pred = pred_ref[...].astype(jnp.float32)
        gt = gt_ref[...].astype(jnp.float32)

        is_pos = gt == 1.0                       # gt.eq(1)
        one_m_pred = 1.0 - pred
        one_m_gt = 1.0 - gt
        omg2 = one_m_gt * one_m_gt

        # pos branch weight: (1 - pred)^2 ; neg branch weight: pred^2 * (1 - gt)^4
        w_pos = one_m_pred * one_m_pred
        w_neg = pred * pred * omg2 * omg2
        # gt > 1 contributes to neither branch (weight 0), matching the reference.
        weight = jnp.where(is_pos, w_pos, jnp.where(gt < 1.0, w_neg, 0.0))
        # single log argument: pred for positives, 1 - pred for everything else
        sel = jnp.where(is_pos, pred, one_m_pred)
        pos_cnt = jnp.where(is_pos, 1.0, 0.0)

        if needs_mask:
            # Last grid block may extend past the real data; out-of-bounds rows
            # contain unspecified values. Replace them with safe neutrals
            # *before* the log so no NaN/Inf is produced.
            row_ids = i * tile_rows + jax.lax.broadcasted_iota(
                jnp.int32, (tile_rows, _LANE), 0)
            valid = row_ids < rows
            sel = jnp.where(valid, sel, 0.5)
            weight = jnp.where(valid, weight, 0.0)
            pos_cnt = jnp.where(valid, pos_cnt, 0.0)

        loss_elem = jnp.log(sel) * weight        # pos_loss + neg_loss, per element

        # Per-lane accumulation: pure VPU adds, no cross-lane work per step.
        loss_acc[...] += loss_elem
        cnt_acc[...] += pos_cnt

        @pl.when(i == pl.num_programs(0) - 1)
        def _():
            total = jnp.sum(loss_acc[...])       # one cross-lane reduce, last step only
            num_pos = jnp.sum(cnt_acc[...])
            # num_pos == 0  =>  pos part of `total` is 0, so -total == -neg_loss.
            out_ref[0] = jnp.where(num_pos == 0.0, -total, -total / num_pos)

    return kernel


def focal_loss(pred, gt, *, tile_rows=2048):
    """Pallas implementation of CornerNet modified focal loss. Returns scalar f32."""
    # Keep f32 / bf16 in their native dtype (halves HBM bytes for bf16);
    # anything else is upcast to f32 in the wrapper.
    if pred.dtype not in (jnp.float32, jnp.bfloat16):
        pred = pred.astype(jnp.float32)
    if gt.dtype not in (jnp.float32, jnp.bfloat16):
        gt = gt.astype(jnp.float32)

    pred_f = pred.reshape(-1)          # free for contiguous NCHW
    gt_f = gt.reshape(-1)
    n = pred_f.shape[0]

    # Sublane alignment: 8 rows for pure-f32, 16 if any bf16 input.
    row_align = 8 if (pred_f.dtype == jnp.float32 and gt_f.dtype == jnp.float32) else 16

    # Minimal padding: only to a multiple of 128 lanes (and at least one
    # aligned row-group for tiny inputs). When n % 128 == 0 this is a no-op,
    # so no extra HBM copy of the inputs. Padding values are "neutral":
    # pred=0.5 (finite log), gt=2.0 (neither pos nor neg -> zero contribution).
    min_elems = row_align * _LANE
    padded_n = max(min_elems, n + ((-n) % _LANE))
    pad = padded_n - n
    if pad:
        pred_f = jnp.pad(pred_f, (0, pad), constant_values=0.5)
        gt_f = jnp.pad(gt_f, (0, pad), constant_values=2.0)

    rows = padded_n // _LANE
    pred2 = pred_f.reshape(rows, _LANE)
    gt2 = gt_f.reshape(rows, _LANE)

    # Effective tile: aligned, never larger than the row count (so any partial
    # block is a standard trailing edge block, masked in-kernel).
    tile_rows = max(row_align, (int(tile_rows) // row_align) * row_align)
    tile_rows = min(tile_rows, (rows // row_align) * row_align)
    needs_mask = (rows % tile_rows) != 0
    grid = pl.cdiv(rows, tile_rows)

    out = pl.pallas_call(
        _make_focal_kernel(rows, tile_rows, needs_mask),
        out_shape=jax.ShapeDtypeStruct((1,), jnp.float32),
        grid_spec=pltpu.PrefetchScalarGridSpec(
            num_scalar_prefetch=0,
            grid=(grid,),
            in_specs=[
                pl.BlockSpec((tile_rows, _LANE), lambda i: (i, 0)),
                pl.BlockSpec((tile_rows, _LANE), lambda i: (i, 0)),
            ],
            out_specs=pl.BlockSpec(memory_space=pltpu.SMEM),
            scratch_shapes=[
                pltpu.VMEM((tile_rows, _LANE), jnp.float32),  # combined loss sum
                pltpu.VMEM((tile_rows, _LANE), jnp.float32),  # num_pos count
            ],
        ),
        compiler_params=pltpu.CompilerParams(
            dimension_semantics=("arbitrary",),  # sequential reduction axis
        ),
    )(pred2, gt2)
    return out[0]


def _focal_loss_ref(pred, gt):
    pred = pred.astype(jnp.float32)
    gt = gt.astype(jnp.float32)
    pos_inds = (gt == 1.0).astype(jnp.float32)
    neg_inds = (gt < 1.0).astype(jnp.float32)
    neg_weights = (1.0 - gt) ** 4
    pos_loss = jnp.log(pred) * (1.0 - pred) ** 2 * pos_inds
    neg_loss = jnp.log(1.0 - pred) * pred ** 2 * neg_weights * neg_inds
    num_pos = pos_inds.sum()
    pos_loss = pos_loss.sum()
    neg_loss = neg_loss.sum()
    return jnp.where(num_pos == 0.0, -neg_loss, -(pos_loss + neg_loss) / num_pos)


if __name__ == "__main__":
    key = jax.random.PRNGKey(0)
    k1, k2, k3 = jax.random.split(key, 3)

    # Main test: NCHW shapes matching the PyTorch convention.
    B, C, H, W = 2, 4, 16, 16
    pred = jax.nn.sigmoid(jax.random.normal(k1, (B, C, H, W), dtype=jnp.float32))
    gt = jax.random.uniform(k2, (B, C, H, W), dtype=jnp.float32, maxval=0.99)
    peak_mask = jax.random.uniform(k3, (B, C, H, W)) > 0.98
    gt = jnp.where(peak_mask, 1.0, gt)

    loss = focal_loss(pred, gt)
    jax.block_until_ready(loss)
    ref = _focal_loss_ref(pred, gt)
    assert jnp.allclose(loss, ref, rtol=1e-5, atol=1e-5), (loss, ref)

    # Odd-sized input: exercises the minimal-pad (neutral values) path.
    shp = (1, 3, 13, 17)
    p2 = jax.nn.sigmoid(jax.random.normal(k1, shp, dtype=jnp.float32))
    g2 = jax.random.uniform(k2, shp, dtype=jnp.float32, maxval=0.99)
    g2 = jnp.where(jax.random.uniform(k3, shp) > 0.97, 1.0, g2)
    loss2 = focal_loss(p2, g2)
    jax.block_until_ready(loss2)
    ref2 = _focal_loss_ref(p2, g2)
    assert jnp.allclose(loss2, ref2, rtol=1e-5, atol=1e-5), (loss2, ref2)

    # Non-dividing grid: exercises the in-kernel masked partial last tile.
    shp3 = (2, 4, 24, 16)   # 3072 elems -> 24 rows, tile_rows=16 -> partial tail
    p3 = jax.nn.sigmoid(jax.random.normal(k2, shp3, dtype=jnp.float32))
    g3 = jax.random.uniform(k3, shp3, dtype=jnp.float32, maxval=0.99)
    g3 = jnp.where(jax.random.uniform(k1, shp3) > 0.98, 1.0, g3)
    loss3 = focal_loss(p3, g3, tile_rows=16)
    jax.block_until_ready(loss3)
    ref3 = _focal_loss_ref(p3, g3)
    assert jnp.allclose(loss3, ref3, rtol=1e-5, atol=1e-5), (loss3, ref3)

    print("KERNEL_OK")
</pallas_src>

<mosaic_0001>
module attributes {stable_mosaic.version = 11 : i64} {
  func.func @kernel(%arg0: i32, %arg1: memref<16x128xf32, #tpu.memory_space<vmem>>, %arg2: memref<16x128xf32, #tpu.memory_space<vmem>>, %arg3: memref<1xf32, #tpu.memory_space<smem>>, %arg4: memref<16x128xf32, #tpu.memory_space<vmem>>, %arg5: memref<16x128xf32, #tpu.memory_space<vmem>>) attributes {dimension_semantics = [#tpu.dimension_semantics<arbitrary>], iteration_bounds = array<i64: 1>, scalar_prefetch = 0 : i64, scratch_operands = 2 : i64, tpu.core_type = #tpu.core_type<tc>, window_params = [{transform_indices = @transform_0, window_bounds = array<i64: 16, 128>}, {transform_indices = @transform_1, window_bounds = array<i64: 16, 128>}, {transform_indices = @transform_2, window_bounds = array<i64: 1>}]} {
    %c0_i32 = arith.constant 0 : i32
    %0 = arith.cmpi eq, %arg0, %c0_i32 : i32
    %1 = arith.extui %0 : i1 to i32
    %c0_i32_0 = arith.constant 0 : i32
    %2 = arith.cmpi ne, %1, %c0_i32_0 : i32
    scf.if %2 {
      %cst_20 = arith.constant 0.000000e+00 : f32
      %36 = vector.broadcast %cst_20 : f32 to vector<16x128xf32>
      %c0_21 = arith.constant 0 : index
      %c0_22 = arith.constant 0 : index
      %37 = vector.load %arg4[%c0_21, %c0_22] : memref<16x128xf32, #tpu.memory_space<vmem>>, vector<16x128xf32>
      tpu.vector_store %arg4[%c0_21, %c0_22], %36 {strides = array<i32>} : memref<16x128xf32, #tpu.memory_space<vmem>>, vector<16x128xf32>,
      %cst_23 = arith.constant 0.000000e+00 : f32
      %38 = vector.broadcast %cst_23 : f32 to vector<16x128xf32>
      %c0_24 = arith.constant 0 : index
      %c0_25 = arith.constant 0 : index
      %39 = vector.load %arg5[%c0_24, %c0_25] : memref<16x128xf32, #tpu.memory_space<vmem>>, vector<16x128xf32>
      tpu.vector_store %arg5[%c0_24, %c0_25], %38 {strides = array<i32>} : memref<16x128xf32, #tpu.memory_space<vmem>>, vector<16x128xf32>,
    } else {
    }
    %c0 = arith.constant 0 : index
    %c0_1 = arith.constant 0 : index
    %3 = vector.load %arg1[%c0, %c0_1] : memref<16x128xf32, #tpu.memory_space<vmem>>, vector<16x128xf32>
    %c0_2 = arith.constant 0 : index
    %c0_3 = arith.constant 0 : index
    %4 = vector.load %arg2[%c0_2, %c0_3] : memref<16x128xf32, #tpu.memory_space<vmem>>, vector<16x128xf32>
    %cst = arith.constant 1.000000e+00 : f32
    %5 = vector.broadcast %cst : f32 to vector<16x128xf32>
    %6 = arith.cmpf oeq, %4, %5 : vector<16x128xf32>
    %cst_4 = arith.constant 1.000000e+00 : f32
    %7 = vector.broadcast %cst_4 : f32 to vector<16x128xf32>
    %8 = arith.subf %7, %3 : vector<16x128xf32>
    %cst_5 = arith.constant 1.000000e+00 : f32
    %9 = vector.broadcast %cst_5 : f32 to vector<16x128xf32>
    %10 = arith.subf %9, %4 : vector<16x128xf32>
    %11 = arith.mulf %10, %10 : vector<16x128xf32>
    %12 = arith.mulf %8, %8 : vector<16x128xf32>
    %13 = arith.mulf %3, %3 : vector<16x128xf32>
    %14 = arith.mulf %13, %11 : vector<16x128xf32>
    %15 = arith.mulf %14, %11 : vector<16x128xf32>
    %cst_6 = arith.constant 1.000000e+00 : f32
    %16 = vector.broadcast %cst_6 : f32 to vector<16x128xf32>
    %17 = arith.cmpf olt, %4, %16 : vector<16x128xf32>
    %cst_7 = arith.constant 0.000000e+00 : f32
    %18 = vector.broadcast %cst_7 : f32 to vector<16x128xf32>
    %19 = arith.select %17, %15, %18 : vector<16x128xi1>, vector<16x128xf32>
    %20 = arith.select %6, %12, %19 : vector<16x128xi1>, vector<16x128xf32>
    %21 = arith.select %6, %3, %8 : vector<16x128xi1>, vector<16x128xf32>
    %cst_8 = arith.constant 1.000000e+00 : f32
    %cst_9 = arith.constant 0.000000e+00 : f32
    %22 = vector.broadcast %cst_8 : f32 to vector<16x128xf32>
    %23 = vector.broadcast %cst_9 : f32 to vector<16x128xf32>
    %24 = arith.select %6, %22, %23 : vector<16x128xi1>, vector<16x128xf32>
    %25 = math.log %21 : vector<16x128xf32>
    %26 = arith.mulf %25, %20 : vector<16x128xf32>
    %c0_10 = arith.constant 0 : index
    %c0_11 = arith.constant 0 : index
    %27 = vector.load %arg4[%c0_10, %c0_11] : memref<16x128xf32, #tpu.memory_space<vmem>>, vector<16x128xf32>
    %28 = arith.addf %27, %26 : vector<16x128xf32>
    %c0_12 = arith.constant 0 : index
    %c0_13 = arith.constant 0 : index
    %29 = vector.load %arg4[%c0_12, %c0_13] : memref<16x128xf32, #tpu.memory_space<vmem>>, vector<16x128xf32>
    tpu.vector_store %arg4[%c0_12, %c0_13], %28 {strides = array<i32>} : memref<16x128xf32, #tpu.memory_space<vmem>>, vector<16x128xf32>,
    %c0_14 = arith.constant 0 : index
    %c0_15 = arith.constant 0 : index
    %30 = vector.load %arg5[%c0_14, %c0_15] : memref<16x128xf32, #tpu.memory_space<vmem>>, vector<16x128xf32>
    %31 = arith.addf %30, %24 : vector<16x128xf32>
    %c0_16 = arith.constant 0 : index
    %c0_17 = arith.constant 0 : index
    %32 = vector.load %arg5[%c0_16, %c0_17] : memref<16x128xf32, #tpu.memory_space<vmem>>, vector<16x128xf32>
    tpu.vector_store %arg5[%c0_16, %c0_17], %31 {strides = array<i32>} : memref<16x128xf32, #tpu.memory_space<vmem>>, vector<16x128xf32>,
    %c0_i32_18 = arith.constant 0 : i32
    %33 = arith.cmpi eq, %arg0, %c0_i32_18 : i32
    %34 = arith.extui %33 : i1 to i32
    %c0_i32_19 = arith.constant 0 : i32
    %35 = arith.cmpi ne, %34, %c0_i32_19 : i32
    scf.if %35 {
      %c0_20 = arith.constant 0 : index
      %c0_21 = arith.constant 0 : index
      %36 = vector.load %arg4[%c0_20, %c0_21] : memref<16x128xf32, #tpu.memory_space<vmem>>, vector<16x128xf32>
      %37 = vector.shape_cast %36 : vector<16x128xf32> to vector<1x16x128xf32>
      %cst_22 = arith.constant dense<0.000000e+00> : vector<1xf32>
      %38 = vector.multi_reduction <add>, %37, %cst_22 [1, 2] : vector<1x16x128xf32> to vector<1xf32>
      %39 = vector.shape_cast %38 : vector<1xf32> to vector<1x1x1xf32>
      %40 = vector.extract %39[0, 0, 0] : f32 from vector<1x1x1xf32>
      %c0_23 = arith.constant 0 : index
      %c0_24 = arith.constant 0 : index
      %41 = vector.load %arg5[%c0_23, %c0_24] : memref<16x128xf32, #tpu.memory_space<vmem>>, vector<16x128xf32>
      %42 = vector.shape_cast %41 : vector<16x128xf32> to vector<1x16x128xf32>
      %cst_25 = arith.constant dense<0.000000e+00> : vector<1xf32>
      %43 = vector.multi_reduction <add>, %42, %cst_25 [1, 2] : vector<1x16x128xf32> to vector<1xf32>
      %44 = vector.shape_cast %43 : vector<1xf32> to vector<1x1x1xf32>
      %45 = vector.extract %44[0, 0, 0] : f32 from vector<1x1x1xf32>
      %cst_26 = arith.constant 0.000000e+00 : f32
      %46 = arith.cmpf oeq, %45, %cst_26 : f32
      %cst_27 = arith.constant 0.000000e+00 : f32
      %47 = arith.subf %cst_27, %40 : f32
      %cst_28 = arith.constant 0.000000e+00 : f32
      %48 = arith.subf %cst_28, %40 : f32
      %49 = arith.divf %48, %45 : f32
      %50 = arith.select %46, %47, %49 : f32
      %c0_29 = arith.constant 0 : index
      %51 = memref.load %arg3[%c0_29] : memref<1xf32, #tpu.memory_space<smem>>
      memref.store %50, %arg3[%c0_29] : memref<1xf32, #tpu.memory_space<smem>>
    } else {
    }
    return
  }
  func.func @transform_0(%arg0: i32) -> (i32, i32) {
    %c0_i32 = arith.constant 0 : i32
    %c0_i32_0 = arith.constant 0 : i32
    return %arg0, %c0_i32 : i32, i32
  }
  func.func @transform_1(%arg0: i32) -> (i32, i32) {
    %c0_i32 = arith.constant 0 : i32
    %c0_i32_0 = arith.constant 0 : i32
    return %arg0, %c0_i32 : i32, i32
  }
  func.func @transform_2(%arg0: i32) -> i32 {
    %c0_i32 = arith.constant 0 : i32
    %c0_i32_0 = arith.constant 0 : i32
    return %c0_i32 : i32
  }
}

</mosaic_0001>

<llo_original>
// kernel: tpu_custom_call.1
$region0: #{tpu_custom_call.1}
  #allocation0 [shape = 'u32[]', space=smem, size = 0x4, offset = 0x4, fixed_abs, tag = 'smem constant byte address 0x4 - core index']
  #allocation1 [shape = 'u32[144,128]{1,0:T(1,128)}', space=vmem, size = 0x12000, scoped, tag = 'internal scratch']
  #allocation2 [shape = 'f32[16,128]{1,0:T(8,128)}', space=vmem, size = 0x2000, scoped, tag = 'scratch operand']
  #allocation3 [shape = 'f32[16,128]{1,0:T(8,128)}', space=vmem, size = 0x2000, scoped, tag = 'scratch operand']
  %s0 = inlined_call_operand.hbm [shape: f32[16,128], index: 0, kind: input, shape index: {}]
  %s1 = inlined_call_operand.hbm [shape: f32[16,128], index: 1, kind: input, shape index: {}]
  %s2 = inlined_call_operand.hbm [shape: f32[1], index: 2, kind: output, shape index: {}]
  %s3 = sld [smem:[#allocation0]]
  $region34: #{tpu_custom_call.1} parent=0
    _
  %s5 = ssub.s32 1, %s3
  %s6 = scalar_select 0, %s5, %s3
  $region1: #{tpu_custom_call.1} parent=0
    #allocation4 [shape = 'u8[8192]{0}', space=vmem, size = 0x2000, scoped, tag = 'input window, operand 0, single buffered']
    #allocation5 [shape = 's32[1]{0}', space=sflag, size = 0x4, scoped, tag = 'scoped memory for tpu_custom_call.1']
    #allocation6 [shape = 's32[1]{0}', space=sflag, size = 0x4, scoped, tag = 'scoped memory for tpu_custom_call.1']
    #allocation7 [shape = 'u8[8192]{0}', space=vmem, size = 0x2000, scoped, tag = 'input window, operand 1, single buffered']
    #allocation8 [shape = 's32[1]{0}', space=sflag, size = 0x4, scoped, tag = 'scoped memory for tpu_custom_call.1']
    #allocation9 [shape = 'u8[512]{0}', space=smem, size = 0x200, scoped, tag = 'output window, operand 0, single buffered']
    %7 = vsyncpa [#allocation5], 0
    %8 = vsyncpa [#allocation8], 0
    %9 = vsyncpa [#allocation6], 0
    // Predicated region
    $region2: #{tpu_custom_call.1} parent=1 // pred_check
      _
    $region3: #{tpu_custom_call.1} parent=1 // pred_check_branch
      %11 = sbr.rel (0) target = $region5
    $region4: #{tpu_custom_call.1} parent=1 // pred_region
      %s13 = ssub.s32 256, 256
      %14 = vsyncadd [#allocation5], %s13
      %s15 = sshll.u32 [#allocation4], 4
      %s16 = int_to_ptr.vmem [resolvable:$true] %s15
      %21 = dma.hbm_to_vmem [thread:$0]  %s0, 256, %s16, [#allocation5], 128, 128, 8
    $region5: #{tpu_custom_call.1} parent=1 // pred_fallthru
      _
    // Predicated region
    $region6: #{tpu_custom_call.1} parent=1 // pred_check
      _
    $region7: #{tpu_custom_call.1} parent=1 // pred_check_branch
      %23 = sbr.rel (0) target = $region9
    $region8: #{tpu_custom_call.1} parent=1 // pred_region
      %s25 = ssub.s32 256, 256
      %26 = vsyncadd [#allocation8], %s25
      %s27 = sshll.u32 [#allocation7], 4
      %s28 = int_to_ptr.vmem [resolvable:$true] %s27
      %33 = dma.hbm_to_vmem [thread:$0]  %s1, 256, %s28, [#allocation8], 128, 128, 8
    $region9: #{tpu_custom_call.1} parent=1 // pred_fallthru
      _
    // Predicated region
    $region10: #{tpu_custom_call.1} parent=1 // pred_check
      _
    $region11: #{tpu_custom_call.1} parent=1 // pred_check_branch
      %35 = sbr.rel (0) target = $region13
    $region12: #{tpu_custom_call.1} parent=1 // pred_region
      %36 = dma.done [#allocation5], 256
    $region13: #{tpu_custom_call.1} parent=1 // pred_fallthru
      _
    // Predicated region
    $region14: #{tpu_custom_call.1} parent=1 // pred_check
      _
    $region15: #{tpu_custom_call.1} parent=1 // pred_check_branch
      %38 = sbr.rel (0) target = $region17
    $region16: #{tpu_custom_call.1} parent=1 // pred_region
      %39 = dma.done [#allocation8], 256
    $region17: #{tpu_custom_call.1} parent=1 // pred_fallthru
      _
    %p40 = scmp.eq.s32.totalorder 0, 0
    // Predicated region
    $region18: #{tpu_custom_call.1} parent=1 // pred_check
      %p41 = pneg %p40
    $region19: #{tpu_custom_call.1} parent=1 // pred_check_branch
      %43 = sbr.rel (%p41) target = $region21
    $region20: #{tpu_custom_call.1} parent=1 // pred_region
      %44 = vst [vmem:[#allocation2] sm:$0xff] 0.0
      %45 = vst [vmem:[#allocation2 + $0x8] sm:$0xff] 0.0
      %46 = vst [vmem:[#allocation3] sm:$0xff] 0.0
      %47 = vst [vmem:[#allocation3 + $0x8] sm:$0xff] 0.0
    $region21: #{tpu_custom_call.1} parent=1 // pred_fallthru
      _
    %v48 = vld [vmem:[#allocation4] sm:$0xff]
    %v49 = vld [vmem:[#allocation4 + $0x8] sm:$0xff]
    %v50 = vld [vmem:[#allocation7] sm:$0xff]
    %v51 = vld [vmem:[#allocation7 + $0x8] sm:$0xff]
    %vm52 = vcmp.eq.f32.partialorder %v50, 1.0
    %vm53 = vcmp.eq.f32.partialorder %v51, 1.0
    %v54 = vsub.f32 1.0, %v48
    %v55 = vsub.f32 1.0, %v49
    %v56 = vsub.f32 1.0, %v50
    %v57 = vsub.f32 1.0, %v51
    %v58 = vmul.f32 %v56, %v56
    %v59 = vmul.f32 %v57, %v57
    %v60 = vmul.f32 %v54, %v54
    %v61 = vmul.f32 %v55, %v55
    %v62 = vmul.f32 %v48, %v48
    %v63 = vmul.f32 %v49, %v49
    %v64 = vmul.f32 %v62, %v58
    %v65 = vmul.f32 %v63, %v59
    %v66 = vmul.f32 %v64, %v58
    %v67 = vmul.f32 %v65, %v59
    %vm68 = vcmp.lt.f32.partialorder %v50, 1.0
    %vm69 = vcmp.lt.f32.partialorder %v51, 1.0
    %v70 = vsel %vm68, %v66, 0.0
    %v71 = vsel %vm69, %v67, 0.0
    %v72 = vsel %vm52, %v60, %v70
    %v73 = vsel %vm53, %v61, %v71
    %v74 = vsel %vm52, %v48, %v54
    %v75 = vsel %vm53, %v49, %v55
    %v76 = vsel %vm52, 1.0, 0.0
    %v77 = vsel %vm53, 1.0, 0.0
    %v78 = vlog2.pop %v74
    %v79 = vmul.f32 %v78, 0.6931472
    %v80 = vlog2.pop %v75
    %v81 = vmul.f32 %v80, 0.6931472
    %v82 = vmul.f32 %v79, %v72
    %v83 = vmul.f32 %v81, %v73
    %v84 = vld [vmem:[#allocation2] sm:$0xff]
    %v85 = vld [vmem:[#allocation2 + $0x8] sm:$0xff]
    %v86 = vadd.f32 %v84, %v82
    %v87 = vadd.f32 %v85, %v83
    %88 = vst [vmem:[#allocation2] sm:$0xff] %v86
    %89 = vst [vmem:[#allocation2 + $0x8] sm:$0xff] %v87
    %v90 = vld [vmem:[#allocation3] sm:$0xff]
    %v91 = vld [vmem:[#allocation3 + $0x8] sm:$0xff]
    %v92 = vadd.f32 %v90, %v76
    %v93 = vadd.f32 %v91, %v77
    %94 = vst [vmem:[#allocation3] sm:$0xff] %v92
    %95 = vst [vmem:[#allocation3 + $0x8] sm:$0xff] %v93
    // Predicated region
    $region22: #{tpu_custom_call.1} parent=1 // pred_check
      %p96 = pneg %p40
    $region23: #{tpu_custom_call.1} parent=1 // pred_check_branch
      %98 = sbr.rel (%p96) target = $region25
    $region24: #{tpu_custom_call.1} parent=1 // pred_region
      %v99 = vld [vmem:[#allocation2] sm:$0xff]
      %v100 = vld [vmem:[#allocation2 + $0x8] sm:$0xff]
      %v101 = vadd.f32 %v99, %v100
      %102 = vadd.xlane.f32.xlu0 %v101
      %v103 = vpop.xlane.xlu0 %102
      %v104 = vrot.slane %v103, 4
      %v105 = vadd.f32 %v103, %v104
      %v106 = vrot.slane %v105, 2
      %v107 = vadd.f32 %v105, %v106
      %v108 = vrot.slane %v107, 1
      %v109 = vadd.f32 %v107, %v108
      %s110 = vtos %v109
      %v111 = vld [vmem:[#allocation3] sm:$0xff]
      %v112 = vld [vmem:[#allocation3 + $0x8] sm:$0xff]
      %v113 = vadd.f32 %v111, %v112
      %114 = vadd.xlane.f32.xlu0 %v113
      %v115 = vpop.xlane.xlu0 %114
      %v116 = vrot.slane %v115, 4
      %v117 = vadd.f32 %v115, %v116
      %v118 = vrot.slane %v117, 2
      %v119 = vadd.f32 %v117, %v118
      %v120 = vrot.slane %v119, 1
      %v121 = vadd.f32 %v119, %v120
      %s122 = vtos %v121
      %p123 = scmp.eq.f32.partialorder %s122, 0.0
      %s124 = ssub.f32 0.0, %s110
      %v125 = vstv %s122
      %v126 = vrcp.pop %v125
      %s127 = vtos %v126
      %s128 = smul.f32 %s124, %s127
      %s129 = scalar_select %p123, %s124, %s128
      %s130 = scalar_lea.smem [#allocation9], 0
      %131 = sst [smem:[%s130]] %s129
    $region25: #{tpu_custom_call.1} parent=1 // pred_fallthru
      _
    // Predicated region
    $region26: #{tpu_custom_call.1} parent=1 // pred_check
      _
    $region27: #{tpu_custom_call.1} parent=1 // pred_check_branch
      %133 = sbr.rel (0) target = $region29
    $region28: #{tpu_custom_call.1} parent=1 // pred_region
      %s135 = ssub.s32 16, 16
      %136 = vsyncadd [#allocation6], %s135
      %139 = dma.smem_to_hbm [#allocation9], 16, %s2, [#allocation6]
    $region29: #{tpu_custom_call.1} parent=1 // pred_fallthru
      _
    // Predicated region
    $region30: #{tpu_custom_call.1} parent=1 // pred_check
      _
    $region31: #{tpu_custom_call.1} parent=1 // pred_check_branch
      %141 = sbr.rel (0) target = $region33
    $region32: #{tpu_custom_call.1} parent=1 // pred_region
      %142 = dma.done [#allocation6], 16
    $region33: #{tpu_custom_call.1} parent=1 // pred_fallthru
      _
    %143 = sfence
    %144 = vsyncpa [#allocation5], 1
    %145 = vsyncpa [#allocation8], 1
    %146 = vsyncpa [#allocation6], 1

</llo_original>
